<compile_context>
chip_gen: v7x
topology: tpu7x:2x2x1
jax: 0.10.0
libtpu: 0.0.40
codegen_flags: <defaults>
</compile_context>

<pallas_src>
import jax
import jax.numpy as jnp
from jax.experimental import pallas as pl
from jax.experimental.pallas import tpu as pltpu

_LANE = 128      # vreg lane width
_SUBLANE = 8     # vreg sublane count (f32)


def _round_up(x: int, m: int) -> int:
    return ((x + m - 1) // m) * m


def _vmem_tile_bytes(rows: int, cols: int, itemsize: int) -> int:
    # A VMEM tile pads its second-to-last dim to 8 sublanes and last dim to 128 lanes.
    return _round_up(max(rows, 1), _SUBLANE) * _round_up(max(cols, 1), _LANE) * itemsize


def qnet_kernel(xT_ref, w1t_ref, b1t_ref, w2t_ref, b2t_ref, o_ref):
    # h = relu(W1^T @ x^T + b1^T)          (hidden, TB) ; MXU matmul, f32 accumulation
    h = jnp.dot(w1t_ref[...], xT_ref[...], preferred_element_type=jnp.float32)
    h = jnp.maximum(h + b1t_ref[...], 0.0)                       # (H, TB) + (H, 1) broadcast
    # out = W2^T @ h + b2^T                (out_f, TB) ; lane-dense store
    # TODO(synk): on v5e the (3,32) second matmul could be a VPU broadcast-FMA to skip the MRF pop.
    o = jnp.dot(w2t_ref[...], h.astype(w2t_ref.dtype), preferred_element_type=jnp.float32)
    o_ref[...] = (o + b2t_ref[...]).astype(o_ref.dtype)


def _choose_tiling(batch: int, block_rows: int):
    """Pick (tb, padded_batch): minimal lane padding, tb derived from the actual batch."""
    padded_min = _round_up(max(batch, 1), _LANE)                 # < 128 wasted rows
    cap = max(_LANE, _round_up(min(block_rows, padded_min), _LANE))
    n_steps = pl.cdiv(padded_min, cap)
    if padded_min >= 2 * 1024:          # enough work: keep >=2 steps for v7x's 2 TensorCores
        n_steps = max(n_steps, 2)
    tb = _round_up(pl.cdiv(padded_min, n_steps), _LANE)
    padded = n_steps * tb
    return tb, padded


def linear_qnet_forward(x, w1, b1, w2, b2, *, block_rows: int = 32768,
                        bf16_inputs: bool = False):
    """Fused two-layer MLP forward, computed transposed (batch on the lane axis).

    x : (batch, in_features)
    w1: (in_features, hidden), b1: (1, hidden)
    w2: (hidden, out_features), b2: (1, out_features)
    returns (batch, out_features) float32
    """
    batch, in_f = x.shape
    hidden = w1.shape[1]
    out_f = w2.shape[1]

    tb, padded = _choose_tiling(batch, block_rows)
    grid = (padded // tb,)

    # Layout plumbing in the wrapper: transpose + pad so batch is the (lane-dense) last dim.
    xT = jnp.pad(x.T, ((0, 0), (0, padded - batch)))             # (in_f, padded)
    w1t = w1.T                                                   # (hidden, in_f)
    w2t = w2.T                                                   # (out_f, hidden)
    b1t = b1.reshape(hidden, 1)
    b2t = b2.reshape(out_f, 1)
    if bf16_inputs:
        # HBM-read-bound: bf16 halves x/weight bytes; MXU still accumulates in f32,
        # bias/ReLU stay f32 (v5e VPU has no bf16).
        xT = xT.astype(jnp.bfloat16)
        w1t = w1t.astype(jnp.bfloat16)
        w2t = w2t.astype(jnp.bfloat16)
    in_itemsize = 2 if bf16_inputs else 4

    # VMEM budget with real (8,128) padding; cap well below v7x's 64 MiB physical VMEM
    # so compiler-internal scratch still fits.
    tile_bytes = (
        2 * _vmem_tile_bytes(in_f, tb, in_itemsize)      # double-buffered x^T tiles
        + 2 * _vmem_tile_bytes(out_f, tb, 4)             # double-buffered output tiles
        + _vmem_tile_bytes(hidden, tb, 4)                # hidden activation tile
        + _vmem_tile_bytes(hidden, in_f, in_itemsize)    # resident W1^T
        + _vmem_tile_bytes(out_f, hidden, in_itemsize)   # resident W2^T
        + _vmem_tile_bytes(hidden, 1, 4)                 # resident b1^T
        + _vmem_tile_bytes(out_f, 1, 4)                  # resident b2^T
    )
    vmem_limit = int(min(48 << 20, max(16 << 20, 2 * tile_bytes)))

    outT = pl.pallas_call(
        qnet_kernel,
        out_shape=jax.ShapeDtypeStruct((out_f, padded), jnp.float32),
        grid_spec=pltpu.PrefetchScalarGridSpec(
            num_scalar_prefetch=0,
            grid=grid,
            in_specs=[
                # x^T: one lane-dense batch tile per grid step (auto double-buffered).
                pl.BlockSpec((in_f, tb), lambda i: (0, i)),
                # Weights / biases: constant block index -> fetched once, resident.
                pl.BlockSpec((hidden, in_f), lambda i: (0, 0)),
                pl.BlockSpec((hidden, 1), lambda i: (0, 0)),
                pl.BlockSpec((out_f, hidden), lambda i: (0, 0)),
                pl.BlockSpec((out_f, 1), lambda i: (0, 0)),
            ],
            # Lane-dense output slab: (out_f, tb) -> unmasked full-width stores.
            out_specs=pl.BlockSpec((out_f, tb), lambda i: (0, i)),
        ),
        compiler_params=pltpu.CompilerParams(
            dimension_semantics=("parallel",),   # batch tiles shard across TCs on v7x
            vmem_limit_bytes=vmem_limit,
        ),
    )(xT, w1t, b1t, w2t, b2t)

    return outT[:, :batch].T                                     # back to (batch, out_f)


def init_params(key, input_size, hidden_size, output_size):
    """Deterministic init matching nn.Linear's U(-1/sqrt(fan_in), 1/sqrt(fan_in))."""
    k1, k2, k3, k4 = jax.random.split(key, 4)
    s1 = 1.0 / jnp.sqrt(input_size)
    s2 = 1.0 / jnp.sqrt(hidden_size)
    w1 = jax.random.uniform(k1, (input_size, hidden_size), jnp.float32, -s1, s1)
    b1 = jax.random.uniform(k2, (1, hidden_size), jnp.float32, -s1, s1)
    w2 = jax.random.uniform(k3, (hidden_size, output_size), jnp.float32, -s2, s2)
    b2 = jax.random.uniform(k4, (1, output_size), jnp.float32, -s2, s2)
    return w1, b1, w2, b2


if __name__ == "__main__":
    # Shapes consistent with the snake-AI usage: 11 state features, small hidden, 3 actions.
    input_size, hidden_size, output_size = 11, 32, 3

    key = jax.random.PRNGKey(0)
    kx, kp, kb = jax.random.split(key, 3)
    w1, b1, w2, b2 = init_params(kp, input_size, hidden_size, output_size)

    def ref_forward(x):
        return jnp.maximum(x @ w1 + b1, 0.0) @ w2 + b2

    def ref_forward_bf16(x):
        h = jnp.maximum(
            jnp.dot(x.astype(jnp.bfloat16), w1.astype(jnp.bfloat16),
                    preferred_element_type=jnp.float32) + b1, 0.0)
        return jnp.dot(h.astype(jnp.bfloat16), w2.astype(jnp.bfloat16),
                       preferred_element_type=jnp.float32) + b2

    # --- Case 1: tiny per-step batch (single grid step; prod callers should prefer
    #             plain jnp for this size and batch states before using the kernel) --
    batch = 8
    x = jax.random.normal(kx, (batch, input_size), jnp.float32)
    out = linear_qnet_forward(x, w1, b1, w2, b2)
    jax.block_until_ready(out)
    assert out.shape == (batch, output_size)
    assert jnp.allclose(out, ref_forward(x), atol=1e-5, rtol=1e-5)

    # --- Case 2: larger, non-tile-aligned batch (exercises grid + padding) ----------
    batch2 = 520
    x2 = jax.random.normal(kb, (batch2, input_size), jnp.float32)
    out2 = linear_qnet_forward(x2, w1, b1, w2, b2, block_rows=256)   # 3 grid steps
    jax.block_until_ready(out2)
    assert out2.shape == (batch2, output_size)
    assert jnp.allclose(out2, ref_forward(x2), atol=1e-5, rtol=1e-5)

    # --- Case 3: optional bf16 HBM reads (f32 accumulation) --------------------------
    out3 = linear_qnet_forward(x2, w1, b1, w2, b2, bf16_inputs=True)
    jax.block_until_ready(out3)
    assert out3.shape == (batch2, output_size)
    assert jnp.allclose(out3, ref_forward_bf16(x2), atol=1e-3, rtol=1e-3)

    print("KERNEL_OK")
</pallas_src>

<mosaic_0001>
module attributes {stable_mosaic.version = 11 : i64} {
  func.func @qnet_kernel(%arg0: i32, %arg1: memref<11x128xf32, #tpu.memory_space<vmem>>, %arg2: memref<32x11xf32, #tpu.memory_space<vmem>>, %arg3: memref<32x1xf32, #tpu.memory_space<vmem>>, %arg4: memref<3x32xf32, #tpu.memory_space<vmem>>, %arg5: memref<3x1xf32, #tpu.memory_space<vmem>>, %arg6: memref<3x128xf32, #tpu.memory_space<vmem>>) attributes {dimension_semantics = [#tpu.dimension_semantics<parallel>], iteration_bounds = array<i64: 1>, scalar_prefetch = 0 : i64, scratch_operands = 0 : i64, tpu.core_type = #tpu.core_type<tc>, window_params = [{transform_indices = @transform_0, window_bounds = array<i64: 11, 128>}, {pipeline_mode = #tpu.pipeline_mode<synchronous>, transform_indices = @transform_1, window_bounds = array<i64: 32, 11>}, {pipeline_mode = #tpu.pipeline_mode<synchronous>, transform_indices = @transform_2, window_bounds = array<i64: 32, 1>}, {pipeline_mode = #tpu.pipeline_mode<synchronous>, transform_indices = @transform_3, window_bounds = array<i64: 3, 32>}, {pipeline_mode = #tpu.pipeline_mode<synchronous>, transform_indices = @transform_4, window_bounds = array<i64: 3, 1>}, {transform_indices = @transform_5, window_bounds = array<i64: 3, 128>}]} {
    %c0 = arith.constant 0 : index
    %c0_0 = arith.constant 0 : index
    %0 = vector.load %arg2[%c0, %c0_0] : memref<32x11xf32, #tpu.memory_space<vmem>>, vector<32x11xf32>
    %c0_1 = arith.constant 0 : index
    %c0_2 = arith.constant 0 : index
    %1 = vector.load %arg1[%c0_1, %c0_2] : memref<11x128xf32, #tpu.memory_space<vmem>>, vector<11x128xf32>
    %cst = arith.constant dense<0.000000e+00> : vector<32x128xf32>
    %2 = tpu.matmul %0, %1, %cst {dimension_numbers = #tpu.dot_dimension_numbers<[1], [0], [0], [1], [0, 0, 1, 1], [], []>} : vector<32x11xf32>, vector<11x128xf32>, vector<32x128xf32> -> vector<32x128xf32>
    %c0_3 = arith.constant 0 : index
    %c0_4 = arith.constant 0 : index
    %3 = vector.load %arg3[%c0_3, %c0_4] : memref<32x1xf32, #tpu.memory_space<vmem>>, vector<32x1xf32>
    %4 = vector.broadcast %3 : vector<32x1xf32> to vector<32x128xf32>
    %5 = arith.addf %2, %4 : vector<32x128xf32>
    %cst_5 = arith.constant 0.000000e+00 : f32
    %6 = vector.broadcast %cst_5 : f32 to vector<32x128xf32>
    %7 = arith.maximumf %5, %6 : vector<32x128xf32>
    %c0_6 = arith.constant 0 : index
    %c0_7 = arith.constant 0 : index
    %8 = vector.load %arg4[%c0_6, %c0_7] : memref<3x32xf32, #tpu.memory_space<vmem>>, vector<3x32xf32>
    %cst_8 = arith.constant dense<0.000000e+00> : vector<3x128xf32>
    %9 = tpu.matmul %8, %7, %cst_8 {dimension_numbers = #tpu.dot_dimension_numbers<[1], [0], [0], [1], [0, 0, 1, 1], [], []>} : vector<3x32xf32>, vector<32x128xf32>, vector<3x128xf32> -> vector<3x128xf32>
    %c0_9 = arith.constant 0 : index
    %c0_10 = arith.constant 0 : index
    %10 = vector.load %arg5[%c0_9, %c0_10] : memref<3x1xf32, #tpu.memory_space<vmem>>, vector<3x1xf32>
    %11 = vector.broadcast %10 : vector<3x1xf32> to vector<3x128xf32>
    %12 = arith.addf %9, %11 : vector<3x128xf32>
    %c0_11 = arith.constant 0 : index
    %c0_12 = arith.constant 0 : index
    %13 = vector.load %arg6[%c0_11, %c0_12] : memref<3x128xf32, #tpu.memory_space<vmem>>, vector<3x128xf32>
    tpu.vector_store %arg6[%c0_11, %c0_12], %12 {strides = array<i32>} : memref<3x128xf32, #tpu.memory_space<vmem>>, vector<3x128xf32>,
    return
  }
  func.func @transform_0(%arg0: i32) -> (i32, i32) {
    %c0_i32 = arith.constant 0 : i32
    %c0_i32_0 = arith.constant 0 : i32
    return %c0_i32, %arg0 : i32, i32
  }
  func.func @transform_1(%arg0: i32) -> (i32, i32) {
    %c0_i32 = arith.constant 0 : i32
    %c0_i32_0 = arith.constant 0 : i32
    %c0_i32_1 = arith.constant 0 : i32
    return %c0_i32, %c0_i32_0 : i32, i32
  }
  func.func @transform_2(%arg0: i32) -> (i32, i32) {
    %c0_i32 = arith.constant 0 : i32
    %c0_i32_0 = arith.constant 0 : i32
    %c0_i32_1 = arith.constant 0 : i32
    return %c0_i32, %c0_i32_0 : i32, i32
  }
  func.func @transform_3(%arg0: i32) -> (i32, i32) {
    %c0_i32 = arith.constant 0 : i32
    %c0_i32_0 = arith.constant 0 : i32
    %c0_i32_1 = arith.constant 0 : i32
    return %c0_i32, %c0_i32_0 : i32, i32
  }
  func.func @transform_4(%arg0: i32) -> (i32, i32) {
    %c0_i32 = arith.constant 0 : i32
    %c0_i32_0 = arith.constant 0 : i32
    %c0_i32_1 = arith.constant 0 : i32
    return %c0_i32, %c0_i32_0 : i32, i32
  }
  func.func @transform_5(%arg0: i32) -> (i32, i32) {
    %c0_i32 = arith.constant 0 : i32
    %c0_i32_0 = arith.constant 0 : i32
    return %c0_i32, %arg0 : i32, i32
  }
}

</mosaic_0001>

<llo_original>
// kernel: tpu_custom_call.1
$region0: #{tpu_custom_call.1}
  #allocation0 [shape = 'u32[]', space=smem, size = 0x4, offset = 0x4, fixed_abs, tag = 'smem constant byte address 0x4 - core index']
  #allocation1 [shape = 'u32[144,128]{1,0:T(1,128)}', space=vmem, size = 0x12000, scoped, tag = 'internal scratch']
  %s0 = inlined_call_operand.vmem [shape: f32[11,128], index: 0, kind: input, shape index: {}]
  %s1 = inlined_call_operand.vmem [shape: f32[32,11], index: 1, kind: input, shape index: {}]
  %s2 = inlined_call_operand.vmem [shape: f32[32,1], index: 2, kind: input, shape index: {}]
  %s3 = inlined_call_operand.vmem [shape: f32[3,32], index: 3, kind: input, shape index: {}]
  %s4 = inlined_call_operand.vmem [shape: f32[3,1], index: 4, kind: input, shape index: {}]
  %s5 = inlined_call_operand.hbm [shape: f32[3,128], index: 5, kind: output, shape index: {}]
  %s6 = sld [smem:[#allocation0]]
  $region30: #{tpu_custom_call.1} parent=0
    _
  %s8 = ssub.s32 1, %s6
  %s9 = scalar_select 0, %s8, %s6
  $region1: #{tpu_custom_call.1} parent=0
    #allocation2 [shape = 'u8[2048]{0}', space=vmem, size = 0x800, scoped, tag = 'output window, operand 0, single buffered']
    #allocation3 [shape = 's32[1]{0}', space=sflag, size = 0x4, scoped, tag = 'scoped memory for tpu_custom_call.1']
    %10 = vsyncpa [#allocation3], 0
    // Predicated region
    $region2: #{tpu_custom_call.1} parent=1 // pred_check
      _
    $region3: #{tpu_custom_call.1} parent=1 // pred_check_branch
      %12 = sbr.rel (0) target = $region5
    $region4: #{tpu_custom_call.1} parent=1 // pred_region
      _
    $region5: #{tpu_custom_call.1} parent=1 // pred_fallthru
      _
    // Predicated region
    $region6: #{tpu_custom_call.1} parent=1 // pred_check
      _
    $region7: #{tpu_custom_call.1} parent=1 // pred_check_branch
      %14 = sbr.rel (0) target = $region9
    $region8: #{tpu_custom_call.1} parent=1 // pred_region
      _
    $region9: #{tpu_custom_call.1} parent=1 // pred_fallthru
      _
    // Predicated region
    $region10: #{tpu_custom_call.1} parent=1 // pred_check
      _
    $region11: #{tpu_custom_call.1} parent=1 // pred_check_branch
      %16 = sbr.rel (0) target = $region13
    $region12: #{tpu_custom_call.1} parent=1 // pred_region
      _
    $region13: #{tpu_custom_call.1} parent=1 // pred_fallthru
      _
    // Predicated region
    $region14: #{tpu_custom_call.1} parent=1 // pred_check
      _
    $region15: #{tpu_custom_call.1} parent=1 // pred_check_branch
      %18 = sbr.rel (0) target = $region17
    $region16: #{tpu_custom_call.1} parent=1 // pred_region
      _
    $region17: #{tpu_custom_call.1} parent=1 // pred_fallthru
      _
    // Predicated region
    $region18: #{tpu_custom_call.1} parent=1 // pred_check
      _
    $region19: #{tpu_custom_call.1} parent=1 // pred_check_branch
      %20 = sbr.rel (0) target = $region21
    $region20: #{tpu_custom_call.1} parent=1 // pred_region
      _
    $region21: #{tpu_custom_call.1} parent=1 // pred_fallthru
      _
    %v21 = vld [vmem:[%s1] sm:$0xff]
    %v22 = vld [vmem:[%s1 + $0x8] sm:$0xff]
    %v23 = vld [vmem:[%s1 + $0x10] sm:$0xff]
    %v24 = vld [vmem:[%s1 + $0x18] sm:$0xff]
    %v25 = vld [vmem:[%s0] sm:$0xff]
    %v26 = vld [vmem:[%s0 + $0x8] sm:$0x7]
    %v27 = vld [vmem:[%s2] sm:$0xff]
    %v28 = vld [vmem:[%s2 + $0x8] sm:$0xff]
    %v29 = vld [vmem:[%s2 + $0x10] sm:$0xff]
    %v30 = vld [vmem:[%s2 + $0x18] sm:$0xff]
    %32 = vset.pattern.permute.xlu0 0
    %33 = vperm.xlu0 %32, %v27
    %v34 = vpop.permute.xlu0 %33
    %37 = vset.pattern.permute.xlu0 0
    %38 = vperm.xlu0 %37, %v28
    %v39 = vpop.permute.xlu0 %38
    %42 = vset.pattern.permute.xlu0 0
    %43 = vperm.xlu0 %42, %v29
    %v44 = vpop.permute.xlu0 %43
    %47 = vset.pattern.permute.xlu0 0
    %48 = vperm.xlu0 %47, %v30
    %v49 = vpop.permute.xlu0 %48
    %vm51 = vcmask 89088
    %v53 = vsel %vm51, %v21, 0
    %v56 = vsel %vm51, %v22, 0
    %v59 = vsel %vm51, %v23, 0
    %v62 = vsel %vm51, %v24, 0
    %vm64 = vcmask 1042432
    %v66 = vsel %vm64, %v26, 0
    %68 = vmatprep.subr.mxu0 0.0
    %69 = vmatpush1.msra.mxu0 %v25
    %70 = vmatprep.subr.mxu0 0.0
    %71 = vmatpush1.msra.mxu0 %v66
    %72 = vmatprep.subr.mxu0 0.0
    %73 = vmatpush1.msra.mxu0 0.0
    %74 = vmatprep.subr.mxu0 0.0
    %75 = vmatpush1.msra.mxu0 0.0
    %76 = vmatprep.subr.mxu0 0.0
    %77 = vmatpush1.msra.mxu0 0.0
    %78 = vmatprep.subr.mxu0 0.0
    %79 = vmatpush1.msra.mxu0 0.0
    %80 = vmatprep.subr.mxu0 0.0
    %81 = vmatpush1.msra.mxu0 0.0
    %82 = vmatprep.subr.mxu0 0.0
    %83 = vmatpush1.msra.mxu0 0.0
    %84 = vmatprep.subr.mxu0 0.0
    %85 = vmatpush1.msra.mxu0 0.0
    %86 = vmatprep.subr.mxu0 0.0
    %87 = vmatpush1.msra.mxu0 0.0
    %88 = vmatprep.subr.mxu0 0.0
    %89 = vmatpush1.msra.mxu0 0.0
    %90 = vmatprep.subr.mxu0 0.0
    %91 = vmatpush1.msra.mxu0 0.0
    %92 = vmatprep.subr.mxu0 0.0
    %93 = vmatpush1.msra.mxu0 0.0
    %94 = vmatprep.subr.mxu0 0.0
    %95 = vmatpush1.msra.mxu0 0.0
    %96 = vmatprep.subr.mxu0 0.0
    %97 = vmatpush1.msra.mxu0 0.0
    %98 = vmatprep.subr.mxu0 0.0
    %99 = vmatpush1.msra.mxu0 0.0
    %100 = vmatprep.subr.mxu0 0.0
    %101 = vmatpush1.msra.mxu0 0.0
    %102 = vmatprep.subr.mxu0 0.0
    %103 = vmatpush1.msra.mxu0 0.0
    %104 = vmatprep.subr.mxu0 0.0
    %105 = vmatpush1.msra.mxu0 0.0
    %106 = vmatprep.subr.mxu0 0.0
    %107 = vmatpush1.msra.mxu0 0.0
    %108 = vmatprep.subr.mxu0 0.0
    %109 = vmatpush1.msra.mxu0 0.0
    %110 = vmatprep.subr.mxu0 0.0
    %111 = vmatpush1.msra.mxu0 0.0
    %112 = vmatprep.subr.mxu0 0.0
    %113 = vmatpush1.msra.mxu0 0.0
    %114 = vmatprep.subr.mxu0 0.0
    %115 = vmatpush1.msra.mxu0 0.0
    %116 = vmatprep.subr.mxu0 0.0
    %117 = vmatpush1.msra.mxu0 0.0
    %118 = vmatprep.subr.mxu0 0.0
    %119 = vmatpush1.msra.mxu0 0.0
    %120 = vmatprep.subr.mxu0 0.0
    %121 = vmatpush1.msra.mxu0 0.0
    %122 = vmatprep.subr.mxu0 0.0
    %123 = vmatpush1.msra.mxu0 0.0
    %124 = vmatprep.subr.mxu0 0.0
    %125 = vmatpush1.msra.mxu0 0.0
    %126 = vmatprep.subr.mxu0 0.0
    %127 = vmatpush1.msra.mxu0 0.0
    %128 = vmatprep.subr.mxu0 0.0
    %129 = vmatpush1.msra.mxu0 0.0
    %130 = vmatprep.subr.mxu0 0.0
    %131 = vmatpush1.msra.mxu0 0.0
    %132 = vmatprep.mubr.f32.mxu0 0.0
    %133 = vmatmul.mubr.f32.gmra.mrb[0].mxu0 %v53
    %v134 = vpop.f32.mrb[0].mxu0
    %v135 = vadd.f32 %v34, %v134
    %v136 = vpop.f32.mrb[0].mxu0
    %137 = vmatprep.mubr.f32.mxu0 0.0
    %138 = vmatmul.mubr.f32.gmra.mrb[0].mxu0 %v56
    %v139 = vpop.f32.mrb[0].mxu0
    %v140 = vadd.f32 %v39, %v139
    %v141 = vpop.f32.mrb[0].mxu0
    %142 = vmatprep.mubr.f32.mxu0 0.0
    %143 = vmatmul.mubr.f32.gmra.mrb[0].mxu0 %v59
    %v144 = vpop.f32.mrb[0].mxu0
    %v145 = vadd.f32 %v44, %v144
    %v146 = vpop.f32.mrb[0].mxu0
    %147 = vmatprep.mubr.f32.mxu0 0.0
    %148 = vmatmul.mubr.f32.gmra.mrb[0].mxu0 %v62
    %v149 = vpop.f32.mrb[0].mxu0
    %v150 = vadd.f32 %v49, %v149
    %v151 = vpop.f32.mrb[0].mxu0
    %152 = vdwg.mxu0
    %v153 = vmax.f32 %v135, 0.0
    %v154 = vmax.f32 %v140, 0.0
    %v155 = vmax.f32 %v145, 0.0
    %v156 = vmax.f32 %v150, 0.0
    %v157 = vld [vmem:[%s3] sm:$0x7]
    %v158 = vld [vmem:[%s4] sm:$0x7]
    %160 = vset.pattern.permute.xlu0 0
    %161 = vperm.xlu0 %160, %v158
    %v162 = vpop.permute.xlu0 %161
    %vm164 = vcmask 261120
    %v166 = vsel %vm164, %v157, 0
    %168 = vmatprep.subr.mxu0 0.0
    %169 = vmatpush1.msra.mxu0 %v153
    %170 = vmatprep.subr.mxu0 0.0
    %171 = vmatpush1.msra.mxu0 %v154
    %172 = vmatprep.subr.mxu0 0.0
    %173 = vmatpush1.msra.mxu0 %v155
    %174 = vmatprep.subr.mxu0 0.0
    %175 = vmatpush1.msra.mxu0 %v156
    %176 = vmatprep.subr.mxu0 0.0
    %177 = vmatpush1.msra.mxu0 0.0
    %178 = vmatprep.subr.mxu0 0.0
    %179 = vmatpush1.msra.mxu0 0.0
    %180 = vmatprep.subr.mxu0 0.0
    %181 = vmatpush1.msra.mxu0 0.0
    %182 = vmatprep.subr.mxu0 0.0
    %183 = vmatpush1.msra.mxu0 0.0
    %184 = vmatprep.subr.mxu0 0.0
    %185 = vmatpush1.msra.mxu0 0.0
    %186 = vmatprep.subr.mxu0 0.0
    %187 = vmatpush1.msra.mxu0 0.0
    %188 = vmatprep.subr.mxu0 0.0
    %189 = vmatpush1.msra.mxu0 0.0
    %190 = vmatprep.subr.mxu0 0.0
    %191 = vmatpush1.msra.mxu0 0.0
    %192 = vmatprep.subr.mxu0 0.0
    %193 = vmatpush1.msra.mxu0 0.0
    %194 = vmatprep.subr.mxu0 0.0
    %195 = vmatpush1.msra.mxu0 0.0
    %196 = vmatprep.subr.mxu0 0.0
    %197 = vmatpush1.msra.mxu0 0.0
    %198 = vmatprep.subr.mxu0 0.0
    %199 = vmatpush1.msra.mxu0 0.0
    %200 = vmatprep.subr.mxu0 0.0
    %201 = vmatpush1.msra.mxu0 0.0
    %202 = vmatprep.subr.mxu0 0.0
    %203 = vmatpush1.msra.mxu0 0.0
    %204 = vmatprep.subr.mxu0 0.0
    %205 = vmatpush1.msra.mxu0 0.0
    %206 = vmatprep.subr.mxu0 0.0
    %207 = vmatpush1.msra.mxu0 0.0
    %208 = vmatprep.subr.mxu0 0.0
    %209 = vmatpush1.msra.mxu0 0.0
    %210 = vmatprep.subr.mxu0 0.0
    %211 = vmatpush1.msra.mxu0 0.0
    %212 = vmatprep.subr.mxu0 0.0
    %213 = vmatpush1.msra.mxu0 0.0
    %214 = vmatprep.subr.mxu0 0.0
    %215 = vmatpush1.msra.mxu0 0.0
    %216 = vmatprep.subr.mxu0 0.0
    %217 = vmatpush1.msra.mxu0 0.0
    %218 = vmatprep.subr.mxu0 0.0
    %219 = vmatpush1.msra.mxu0 0.0
    %220 = vmatprep.subr.mxu0 0.0
    %221 = vmatpush1.msra.mxu0 0.0
    %222 = vmatprep.subr.mxu0 0.0
    %223 = vmatpush1.msra.mxu0 0.0
    %224 = vmatprep.subr.mxu0 0.0
    %225 = vmatpush1.msra.mxu0 0.0
    %226 = vmatprep.subr.mxu0 0.0
    %227 = vmatpush1.msra.mxu0 0.0
    %228 = vmatprep.subr.mxu0 0.0
    %229 = vmatpush1.msra.mxu0 0.0
    %230 = vmatprep.subr.mxu0 0.0
    %231 = vmatpush1.msra.mxu0 0.0
    %232 = vmatprep.mubr.f32.mxu0 0.0
    %233 = vmatmul.mubr.f32.gmra.mrb[0].mxu0 %v166
    %v234 = vpop.f32.mrb[0].mxu0
    %v235 = vadd.f32 %v162, %v234
    %v236 = vpop.f32.mrb[0].mxu0
    %237 = vdwg.mxu0
    %238 = vst [vmem:[#allocation2] sm:$0x7] %v235
    // Predicated region
    $region22: #{tpu_custom_call.1} parent=1 // pred_check
      _
    $region23: #{tpu_custom_call.1} parent=1 // pred_check_branch
      %240 = sbr.rel (0) target = $region25
    $region24: #{tpu_custom_call.1} parent=1 // pred_region
      %s242 = ssub.s32 64, 64
      %243 = vsyncadd [#allocation3], %s242
      %s245 = sshll.u32 [#allocation2], 4
      %s246 = int_to_ptr.vmem [resolvable:$true] %s245
      %248 = dma.vmem_to_hbm [thread:$0]  %s246, 64, %s5, [#allocation3]
    $region25: #{tpu_custom_call.1} parent=1 // pred_fallthru
      _
    // Predicated region
    $region26: #{tpu_custom_call.1} parent=1 // pred_check
      _
    $region27: #{tpu_custom_call.1} parent=1 // pred_check_branch
      %250 = sbr.rel (0) target = $region29
    $region28: #{tpu_custom_call.1} parent=1 // pred_region
      %251 = dma.done [#allocation3], 64
    $region29: #{tpu_custom_call.1} parent=1 // pred_fallthru
      _
    %252 = vsyncpa [#allocation3], 1

</llo_original>
